<compile_context>
chip_gen: v5e
topology: v5e:2x2
jax: 0.10.0
libtpu: 0.0.40
codegen_flags: <defaults>
</compile_context>

<pallas_src>
import functools

import jax
import jax.numpy as jnp
from jax import lax
from jax.experimental import pallas as pl
from jax.experimental.pallas import tpu as pltpu


# --------------------------------------------------------------------------- #
# Padding / tile-selection helpers (generation-aware via get_tpu_info)
# --------------------------------------------------------------------------- #
def _round_up(x, m):
    return (x + m - 1) // m * m


def _pad2d(x, rows, cols):
    x = x.astype(jnp.float32)
    r, c = x.shape
    if r == rows and c == cols:
        return x
    return jnp.pad(x, ((0, rows - r), (0, cols - c)))


def _pad_rows(m):
    """Row padding for the stacked constraint matrix; keeps tm=256 a divisor for big M."""
    mp = _round_up(m, 8)
    if mp > 256:
        mp = _round_up(m, 256)
    return mp


@functools.lru_cache(maxsize=None)
def _vmem_budget_and_limit():
    """v7x has 64 MiB VMEM/TC vs 128 MiB on v5e/v6e; gate tile choice on capacity and
    raise the scoped-VMEM compiler limit (default 16/32 MiB) to match."""
    try:
        cap = int(getattr(pltpu.get_tpu_info(), "vmem_capacity_bytes", 128 << 20))
    except Exception:
        cap = 128 << 20
    budget = min(cap // 3, 32 << 20)        # per-call operand-footprint target
    limit = min((cap * 3) // 4, 64 << 20)   # vmem_limit_bytes passed to the compiler
    return budget, limit


def _largest_aligned_divisor(dim, cap, align):
    """Largest multiple of `align` that divides `dim`, capped at `cap`."""
    cap = max(cap, align)
    best = align
    t = align
    limit = min(cap, dim)
    while t <= limit:
        if dim % t == 0:
            best = t
        t += align
    return best


def _mm_tiles(Mp, Kp, Np):
    budget, _ = _vmem_budget_and_limit()
    tm = _largest_aligned_divisor(Mp, 256, 8)      # >=256-wide blocks fill the 2x256 MXU
    tk = _largest_aligned_divisor(Kp, 1024, 128)   # big K tiles amortise grid-step cost
    tn = _largest_aligned_divisor(Np, 512, 128)    # and cut accumulator RMW traffic

    def footprint(tm_, tk_, tn_):
        # double-buffered C/A/B/out tiles + f32 accumulator scratch, in bytes
        return 4 * (2 * tm_ * tk_ + 4 * tk_ * tn_ + 3 * tm_ * tn_)

    while footprint(tm, tk, tn) > budget:
        if tk > 128:
            tk = _largest_aligned_divisor(Kp, tk - 128, 128)
        elif tn > 128:
            tn = _largest_aligned_divisor(Np, tn - 128, 128)
        elif tm > 8:
            tm = _largest_aligned_divisor(Mp, tm - 8, 8)
        else:
            break

    # Make sure both v7x TensorCores get a parallel block even for tiny layers.
    if Mp // tm == 1 and Np // tn == 1:
        half = _largest_aligned_divisor(Mp, Mp // 2, 8)
        if half < Mp:
            tm = half
    return tm, tk, tn


# --------------------------------------------------------------------------- #
# Kernel 1: fused sign-split matmul   out = max(C,0) @ A + min(C,0) @ B
# (== relu(C) @ A - relu(-C) @ B, but inf-safe and a single accumulator RMW)
# --------------------------------------------------------------------------- #
def _resolve_mm_kernel(c_ref, a_ref, b_ref, o_ref, acc_ref):
    @pl.when(pl.program_id(2) == 0)
    def _init():
        acc_ref[...] = jnp.zeros_like(acc_ref)

    c = c_ref[...]
    pos = jnp.maximum(c, 0.0)
    neg = jnp.minimum(c, 0.0)
    # Single read-modify-write of the f32 VMEM accumulator per K step
    # (v5e has only one vector-store slot per bundle).
    acc_ref[...] += (jnp.dot(pos, a_ref[...], preferred_element_type=jnp.float32)
                     + jnp.dot(neg, b_ref[...], preferred_element_type=jnp.float32))

    @pl.when(pl.program_id(2) == pl.num_programs(2) - 1)
    def _finalize():
        o_ref[...] = acc_ref[...].astype(o_ref.dtype)


def resolve_mm_pallas(c, a, b):
    """Back-substitute stacked constraints C (Mp,Kp) through dense symbolic bounds
    A/B (Kp,Np).  All operands are pre-padded (once, at save() time)."""
    Mp, Kp = c.shape
    Kp2, Np = a.shape
    assert Kp2 == Kp and b.shape == (Kp, Np)
    tm, tk, tn = _mm_tiles(Mp, Kp, Np)
    _, vmem_limit = _vmem_budget_and_limit()
    # TODO(synk): optionally cast A/B to bf16 (f32 accumulate) on v6e/v7x once the
    # DeepPoly soundness tolerance for that is established.
    return pl.pallas_call(
        _resolve_mm_kernel,
        out_shape=jax.ShapeDtypeStruct((Mp, Np), jnp.float32),
        grid_spec=pltpu.PrefetchScalarGridSpec(
            num_scalar_prefetch=0,
            grid=(Mp // tm, Np // tn, Kp // tk),          # reduction axis last
            in_specs=[
                pl.BlockSpec((tm, tk), lambda i, j, k: (i, k)),
                pl.BlockSpec((tk, tn), lambda i, j, k: (k, j)),
                pl.BlockSpec((tk, tn), lambda i, j, k: (k, j)),
            ],
            out_specs=pl.BlockSpec((tm, tn), lambda i, j, k: (i, j)),
            scratch_shapes=[pltpu.VMEM((tm, tn), jnp.float32)],
        ),
        compiler_params=pltpu.CompilerParams(
            dimension_semantics=("parallel", "parallel", "arbitrary"),
            vmem_limit_bytes=vmem_limit),
    )(c, a, b)


# --------------------------------------------------------------------------- #
# Kernel 2: diagonal (ReLU) layer back-substitution — O(M*K) VPU work
#   out[:, j<K] = max(C,0)*slope_l[j] + min(C,0)*slope_u[j]
#   out[:, K]   = C[:, K] + max(C,0)@bias_l + min(C,0)@bias_u
# (the keep-bias row of the original dense form is encoded by slope[K] = 1)
# --------------------------------------------------------------------------- #
def _resolve_diag_kernel(c_ref, sl_ref, su_ref, bl_ref, bu_ref, oh_ref, o_ref):
    c = c_ref[...]
    pos = jnp.maximum(c, 0.0)
    neg = jnp.minimum(c, 0.0)
    out = pos * sl_ref[...] + neg * su_ref[...]
    bias_add = jnp.sum(pos * bl_ref[...] + neg * bu_ref[...], axis=1, keepdims=True)
    o_ref[...] = out + bias_add * oh_ref[...]


def resolve_diag_pallas(c, scale_l, scale_u, bias_l, bias_u, onehot):
    Mp, Kcp = c.shape
    assert scale_l.shape == (1, Kcp)
    budget, vmem_limit = _vmem_budget_and_limit()
    tm = _largest_aligned_divisor(Mp, 256, 8)
    while 4 * (4 * tm * Kcp + 10 * Kcp) > budget and tm > 8:
        tm = _largest_aligned_divisor(Mp, tm - 8, 8)
    if Mp // tm == 1:                       # second v7x TensorCore gets a block
        half = _largest_aligned_divisor(Mp, Mp // 2, 8)
        if half < Mp:
            tm = half
    # TODO(synk): tile the K axis too (with a bias-column accumulator) for extremely
    # wide layers; typical DeepPoly widths fit a full-K block comfortably.
    row_spec = pl.BlockSpec((1, Kcp), lambda i: (0, 0))
    return pl.pallas_call(
        _resolve_diag_kernel,
        out_shape=jax.ShapeDtypeStruct((Mp, Kcp), jnp.float32),
        grid_spec=pltpu.PrefetchScalarGridSpec(
            num_scalar_prefetch=0,
            grid=(Mp // tm,),
            in_specs=[pl.BlockSpec((tm, Kcp), lambda i: (i, 0)),
                      row_spec, row_spec, row_spec, row_spec, row_spec],
            out_specs=pl.BlockSpec((tm, Kcp), lambda i: (i, 0)),
        ),
        compiler_params=pltpu.CompilerParams(
            dimension_semantics=("parallel",),
            vmem_limit_bytes=vmem_limit),
    )(c, scale_l, scale_u, bias_l, bias_u, onehot)


# --------------------------------------------------------------------------- #
# Kernel 3: layer-0 concrete resolution — VPU multiply + lane reduction
# (replaces the former N=1 padded-to-128-lanes MXU matmul)
# --------------------------------------------------------------------------- #
def _resolve_concrete_kernel(c_ref, lb_ref, ub_ref, o_ref, acc_ref):
    @pl.when(pl.program_id(1) == 0)
    def _init():
        acc_ref[...] = jnp.zeros_like(acc_ref)

    c = c_ref[...]
    contrib = jnp.maximum(c, 0.0) * lb_ref[...] + jnp.minimum(c, 0.0) * ub_ref[...]
    acc_ref[...] += jnp.sum(contrib, axis=1, keepdims=True)

    @pl.when(pl.program_id(1) == pl.num_programs(1) - 1)
    def _finalize():
        o_ref[...] = acc_ref[...]


def resolve_concrete_pallas(c, lb_row, ub_row):
    Mp, Kp = c.shape
    assert lb_row.shape == (1, Kp) and ub_row.shape == (1, Kp)
    _, vmem_limit = _vmem_budget_and_limit()
    tm = _largest_aligned_divisor(Mp, 256, 8)
    tk = _largest_aligned_divisor(Kp, 1024, 128)
    out = pl.pallas_call(
        _resolve_concrete_kernel,
        out_shape=jax.ShapeDtypeStruct((Mp, 1), jnp.float32),
        grid_spec=pltpu.PrefetchScalarGridSpec(
            num_scalar_prefetch=0,
            grid=(Mp // tm, Kp // tk),
            in_specs=[pl.BlockSpec((tm, tk), lambda i, k: (i, k)),
                      pl.BlockSpec((1, tk), lambda i, k: (0, k)),
                      pl.BlockSpec((1, tk), lambda i, k: (0, k))],
            out_specs=pl.BlockSpec((tm, 1), lambda i, k: (i, 0)),
            scratch_shapes=[pltpu.VMEM((tm, 1), jnp.float32)],
        ),
        compiler_params=pltpu.CompilerParams(
            dimension_semantics=("parallel", "arbitrary"),
            vmem_limit_bytes=vmem_limit),
    )(c, lb_row, ub_row)
    return out[:, 0]


# --------------------------------------------------------------------------- #
# History entries — padded / vectorised ONCE at save() time
# --------------------------------------------------------------------------- #
class _ConcreteEntry:
    """Input-layer box bounds, as lane-padded (1, Kp) rows."""
    kind = "concrete"

    def __init__(self, lb, ub):
        k = lb.shape[0] + 1
        self.cols = _round_up(k, 128)
        lb_ext = jnp.concatenate([lb.astype(jnp.float32), jnp.ones((1,), jnp.float32)])
        ub_ext = jnp.concatenate([ub.astype(jnp.float32), jnp.ones((1,), jnp.float32)])
        self.lb_row = _pad2d(lb_ext[None, :], 1, self.cols)
        self.ub_row = _pad2d(ub_ext[None, :], 1, self.cols)


class _DenseEntry:
    """Dense symbolic layer (affine): [slb; keep_bias] padded to (Kp, Np)."""
    kind = "dense"

    def __init__(self, slb, sub):
        slb = slb.astype(jnp.float32)
        sub = sub.astype(jnp.float32)
        r, c = slb.shape                              # (out_i, in_i + 1)
        keep = jnp.zeros((1, c), jnp.float32).at[0, -1].set(1.0)
        self.rows = _round_up(r + 1, 128)             # padded K(+1) of the matmul
        self.cols = _round_up(c, 128)
        self.a_pad = _pad2d(jnp.concatenate([slb, keep], axis=0), self.rows, self.cols)
        self.b_pad = _pad2d(jnp.concatenate([sub, keep], axis=0), self.rows, self.cols)


class _DiagEntry:
    """Diagonal symbolic layer (ReLU): per-neuron slope/bias vectors, lane-padded."""
    kind = "diag"

    def __init__(self, d_l, b_l, d_u, b_u):
        k = d_l.shape[0]
        self.rows = _round_up(k + 1, 128)
        self.cols = self.rows

        def row(vec, last):
            r = jnp.zeros((self.rows,), jnp.float32).at[:k].set(vec.astype(jnp.float32))
            r = r.at[k].set(jnp.float32(last))
            return r[None, :]

        self.scale_l = row(d_l, 1.0)   # slope[K]=1 passes the bias column through
        self.scale_u = row(d_u, 1.0)
        self.bias_l = row(b_l, 0.0)
        self.bias_u = row(b_u, 0.0)
        self.onehot = jnp.zeros((1, self.rows), jnp.float32).at[0, k].set(1.0)


# --------------------------------------------------------------------------- #
# DeepPoly abstract element (host-side bookkeeping only)
# --------------------------------------------------------------------------- #
class DeepPolyElement:
    def __init__(self, lb, ub):
        self.lb = lb.astype(jnp.float32)
        self.ub = ub.astype(jnp.float32)
        self.slb = None
        self.sub = None
        self.sym_kind = "input"
        self.history = []
        self.layers = 0

    def set_dense_symbolic(self, slb, sub):
        self.sym_kind = "dense"
        self.slb = slb
        self.sub = sub

    def set_diag_symbolic(self, d_l, b_l, d_u, b_u):
        self.sym_kind = "diag"
        self.slb = (d_l, b_l)
        self.sub = (d_u, b_u)

    def save(self):
        if not self.history:
            entry = _ConcreteEntry(self.lb, self.ub)
        elif self.sym_kind == "dense":
            entry = _DenseEntry(self.slb, self.sub)
        elif self.sym_kind == "diag":
            entry = _DiagEntry(self.slb[0], self.slb[1], self.sub[0], self.sub[1])
        else:
            raise ValueError("element has no symbolic constraints to save")
        self.history.append(entry)
        self.layers += 1
        return self


# --------------------------------------------------------------------------- #
# Pallas-backed DPLinear / DPReLU
# --------------------------------------------------------------------------- #
class DPLinearPallas:
    """Pallas-backed port of the PyTorch DPLinear.forward."""

    def __init__(self, weight, bias):
        self.weight = jnp.asarray(weight, jnp.float32)
        self.bias = jnp.asarray(bias, jnp.float32)
        self.out_features, self.in_features = self.weight.shape

    def forward(self, x):
        x.save()
        init_slb = jnp.concatenate([self.weight, self.bias[:, None]], axis=1)
        x.lb = init_slb
        x.ub = init_slb
        x.set_dense_symbolic(init_slb, init_slb)

        # Fused lower/upper back-substitution: maintain S = [C_lb; -C_ub].
        # resolve_lower(S) == [D_lb; -D_ub], so one kernel call per history layer
        # covers both bounds and each history operand is streamed from HBM once.
        m = self.out_features
        M = 2 * m
        Mp = _pad_rows(M)
        cols = _round_up(self.in_features + 1, 128)
        S = _pad2d(jnp.concatenate([init_slb, -init_slb], axis=0), Mp, cols)

        lb_new = ub_new = None
        for i in range(x.layers, 0, -1):
            entry = x.history[i - 1]
            if entry.kind == "concrete":        # layer 0: concrete box resolution
                assert S.shape[1] == entry.cols
                v = resolve_concrete_pallas(S, entry.lb_row, entry.ub_row)
                lb_new = v[:m]
                ub_new = -v[m:M]
            elif entry.kind == "dense":         # affine layer: MXU matmul kernel
                assert S.shape[1] == entry.rows
                S = resolve_mm_pallas(S, entry.a_pad, entry.b_pad)
            else:                               # ReLU layer: diagonal VPU kernel
                assert S.shape[1] == entry.rows
                S = resolve_diag_pallas(S, entry.scale_l, entry.scale_u,
                                        entry.bias_l, entry.bias_u, entry.onehot)
        # TODO(synk): fuse the whole loop into one pallas_call (running C resident in
        # VMEM, history streamed via emit_pipeline over pl.ANY refs) for deep nets.
        x.lb = lb_new
        x.ub = ub_new
        return x


class DPReLUPallas:
    """DeepPoly ReLU transformer (scaffolding) keeping a diagonal symbolic history."""

    def __init__(self, alpha):
        self.alpha = jnp.asarray(alpha, jnp.float32)

    def forward(self, x):
        x.save()
        low, up = x.lb, x.ub
        mask_1 = (low >= 0.0).astype(jnp.float32)
        mask_2 = (up <= 0.0).astype(jnp.float32)
        mask_3 = 1.0 - jnp.maximum(mask_1, mask_2)
        relu_low = jnp.maximum(low, 0.0)
        relu_up = jnp.maximum(up, 0.0)
        denom = jnp.where(up - low > 0.0, up - low, 1.0)   # NaN guard when up == low
        slope_up_3 = (relu_up - relu_low) / denom
        bias_up_3 = relu_up - slope_up_3 * up
        curr_slb = mask_1 + self.alpha * mask_3
        curr_slb_bias = jnp.zeros_like(low)
        curr_sub = mask_1 + slope_up_3 * mask_3
        curr_sub_bias = bias_up_3 * mask_3
        x.lb = relu_low
        x.ub = relu_up
        x.set_diag_symbolic(curr_slb, curr_slb_bias, curr_sub, curr_sub_bias)
        return x


# --------------------------------------------------------------------------- #
# Pure-JAX dense reference (faithful port of the original module, for validation)
# --------------------------------------------------------------------------- #
def _ref_resolve(C, lb, ub):
    hi = lax.Precision.HIGHEST
    pos = jnp.maximum(C, 0.0)
    neg = jnp.minimum(C, 0.0)
    return jnp.matmul(pos, lb, precision=hi) + jnp.matmul(neg, ub, precision=hi)


class _RefElement:
    def __init__(self, lb, ub):
        n = lb.shape[0]
        self.slb = jnp.concatenate(
            [jnp.eye(n, dtype=jnp.float32), jnp.zeros((n, 1), jnp.float32)], axis=1)
        self.sub = self.slb
        self.lb = lb.astype(jnp.float32)
        self.ub = ub.astype(jnp.float32)
        self.history = []
        self.layers = 0

    def save(self):
        lb_ext = jnp.concatenate([self.lb, jnp.ones((1,), jnp.float32)])
        ub_ext = jnp.concatenate([self.ub, jnp.ones((1,), jnp.float32)])
        keep = jnp.zeros((1, self.slb.shape[1]), jnp.float32).at[0, -1].set(1.0)
        self.history.append((jnp.concatenate([self.slb, keep], axis=0),
                             jnp.concatenate([self.sub, keep], axis=0),
                             lb_ext, ub_ext))
        self.layers += 1
        return self

    def resolve(self, constrains, layer, lower=True):
        slb_e, sub_e, lb_e, ub_e = self.history[layer]
        if layer == 0:
            lb, ub = lb_e, ub_e
        else:
            lb, ub = slb_e, sub_e
        if not lower:
            lb, ub = ub, lb
        return _ref_resolve(constrains, lb, ub)


class _RefDPLinear:
    def __init__(self, weight, bias):
        self.weight = jnp.asarray(weight, jnp.float32)
        self.bias = jnp.asarray(bias, jnp.float32)

    def forward(self, x):
        x.save()
        init_slb = jnp.concatenate([self.weight, self.bias[:, None]], axis=1)
        x.lb = init_slb
        x.ub = init_slb
        x.slb = init_slb
        x.sub = init_slb
        for i in range(x.layers, 0, -1):
            x.lb = x.resolve(x.lb, i - 1, lower=True)
            x.ub = x.resolve(x.ub, i - 1, lower=False)
        return x


class _RefDPReLU:
    def __init__(self, alpha):
        self.alpha = jnp.asarray(alpha, jnp.float32)

    def forward(self, x):
        x.save()
        low, up = x.lb, x.ub
        mask_1 = (low >= 0.0).astype(jnp.float32)
        mask_2 = (up <= 0.0).astype(jnp.float32)
        mask_3 = 1.0 - jnp.maximum(mask_1, mask_2)
        relu_low = jnp.maximum(low, 0.0)
        relu_up = jnp.maximum(up, 0.0)
        denom = jnp.where(up - low > 0.0, up - low, 1.0)
        slope_up_3 = (relu_up - relu_low) / denom
        bias_up_3 = relu_up - slope_up_3 * up
        curr_slb = mask_1 + self.alpha * mask_3
        curr_slb_bias = jnp.zeros_like(low)
        curr_sub = mask_1 + slope_up_3 * mask_3
        curr_sub_bias = bias_up_3 * mask_3
        x.lb = relu_low
        x.ub = relu_up
        x.slb = jnp.concatenate([jnp.diag(curr_slb), curr_slb_bias[:, None]], axis=1)
        x.sub = jnp.concatenate([jnp.diag(curr_sub), curr_sub_bias[:, None]], axis=1)
        return x


# --------------------------------------------------------------------------- #
if __name__ == "__main__":
    in0, hidden, out = 16, 32, 24

    key = jax.random.PRNGKey(0)
    k = jax.random.split(key, 7)
    w1 = jax.random.normal(k[0], (hidden, in0), jnp.float32) * 0.3
    b1 = jax.random.normal(k[1], (hidden,), jnp.float32) * 0.1
    w2 = jax.random.normal(k[2], (out, hidden), jnp.float32) * 0.3
    b2 = jax.random.normal(k[3], (out,), jnp.float32) * 0.1
    alpha = jax.random.uniform(k[4], (hidden,), jnp.float32)
    center = jax.random.uniform(k[5], (in0,), jnp.float32, minval=-1.0, maxval=1.0)
    radius = jax.random.uniform(k[6], (in0,), jnp.float32, minval=0.05, maxval=0.5)
    lb0, ub0 = center - radius, center + radius

    # Pallas path: linear -> relu -> linear (module under test is the final DPLinear,
    # whose forward performs the full 3-layer back-substitution).
    xp = DeepPolyElement(lb0, ub0)
    xp = DPLinearPallas(w1, b1).forward(xp)
    xp = DPReLUPallas(alpha).forward(xp)
    xp = DPLinearPallas(w2, b2).forward(xp)
    jax.block_until_ready((xp.lb, xp.ub, xp.slb, xp.sub))

    # Faithful dense reference path.
    xr = _RefElement(lb0, ub0)
    xr = _RefDPLinear(w1, b1).forward(xr)
    xr = _RefDPReLU(alpha).forward(xr)
    xr = _RefDPLinear(w2, b2).forward(xr)

    assert xp.lb.shape == (out,) and xp.ub.shape == (out,)
    assert xp.slb.shape == (out, hidden + 1) and xp.sub.shape == (out, hidden + 1)
    assert jnp.allclose(xp.lb, xr.lb, atol=1e-4, rtol=1e-4)
    assert jnp.allclose(xp.ub, xr.ub, atol=1e-4, rtol=1e-4)
    assert jnp.allclose(xp.slb, xr.slb, atol=1e-6)
    assert jnp.allclose(xp.sub, xr.sub, atol=1e-6)
    assert bool(jnp.all(xp.lb <= xp.ub + 1e-5))   # soundness sanity check

    print("KERNEL_OK")
</pallas_src>

<mosaic_0001>
module attributes {stable_mosaic.version = 11 : i64} {
  func.func @_resolve_concrete_kernel(%arg0: i32, %arg1: i32, %arg2: memref<64x128xf32, #tpu.memory_space<vmem>>, %arg3: memref<1x128xf32, #tpu.memory_space<vmem>>, %arg4: memref<1x128xf32, #tpu.memory_space<vmem>>, %arg5: memref<64x1xf32, #tpu.memory_space<vmem>>, %arg6: memref<64x1xf32, #tpu.memory_space<vmem>>) attributes {dimension_semantics = [#tpu.dimension_semantics<parallel>, #tpu.dimension_semantics<arbitrary>], iteration_bounds = array<i64: 1, 1>, scalar_prefetch = 0 : i64, scratch_operands = 1 : i64, tpu.core_type = #tpu.core_type<tc>, window_params = [{transform_indices = @transform_0, window_bounds = array<i64: 64, 128>}, {transform_indices = @transform_1, window_bounds = array<i64: 1, 128>}, {transform_indices = @transform_2, window_bounds = array<i64: 1, 128>}, {transform_indices = @transform_3, window_bounds = array<i64: 64, 1>}]} {
    %c0_i32 = arith.constant 0 : i32
    %0 = arith.cmpi eq, %arg1, %c0_i32 : i32
    %1 = arith.extui %0 : i1 to i32
    %c0_i32_0 = arith.constant 0 : i32
    %2 = arith.cmpi ne, %1, %c0_i32_0 : i32
    scf.if %2 {
      %cst_14 = arith.constant 0.000000e+00 : f32
      %23 = vector.broadcast %cst_14 : f32 to vector<64x1xf32>
      %c0_15 = arith.constant 0 : index
      %c0_16 = arith.constant 0 : index
      %24 = vector.load %arg6[%c0_15, %c0_16] : memref<64x1xf32, #tpu.memory_space<vmem>>, vector<64x1xf32>
      tpu.vector_store %arg6[%c0_15, %c0_16], %23 {strides = array<i32>} : memref<64x1xf32, #tpu.memory_space<vmem>>, vector<64x1xf32>,
    } else {
    }
    %c0 = arith.constant 0 : index
    %c0_1 = arith.constant 0 : index
    %3 = vector.load %arg2[%c0, %c0_1] : memref<64x128xf32, #tpu.memory_space<vmem>>, vector<64x128xf32>
    %cst = arith.constant 0.000000e+00 : f32
    %4 = vector.broadcast %cst : f32 to vector<64x128xf32>
    %5 = arith.maximumf %3, %4 : vector<64x128xf32>
    %c0_2 = arith.constant 0 : index
    %c0_3 = arith.constant 0 : index
    %6 = vector.load %arg3[%c0_2, %c0_3] : memref<1x128xf32, #tpu.memory_space<vmem>>, vector<1x128xf32>
    %7 = vector.broadcast %6 : vector<1x128xf32> to vector<64x128xf32>
    %8 = arith.mulf %5, %7 : vector<64x128xf32>
    %cst_4 = arith.constant 0.000000e+00 : f32
    %9 = vector.broadcast %cst_4 : f32 to vector<64x128xf32>
    %10 = arith.minimumf %3, %9 : vector<64x128xf32>
    %c0_5 = arith.constant 0 : index
    %c0_6 = arith.constant 0 : index
    %11 = vector.load %arg4[%c0_5, %c0_6] : memref<1x128xf32, #tpu.memory_space<vmem>>, vector<1x128xf32>
    %12 = vector.broadcast %11 : vector<1x128xf32> to vector<64x128xf32>
    %13 = arith.mulf %10, %12 : vector<64x128xf32>
    %14 = arith.addf %8, %13 : vector<64x128xf32>
    %c0_7 = arith.constant 0 : index
    %c0_8 = arith.constant 0 : index
    %15 = vector.load %arg6[%c0_7, %c0_8] : memref<64x1xf32, #tpu.memory_space<vmem>>, vector<64x1xf32>
    %cst_9 = arith.constant dense<0.000000e+00> : vector<64xf32>
    %16 = vector.multi_reduction <add>, %14, %cst_9 [1] : vector<64x128xf32> to vector<64xf32>
    %17 = vector.shape_cast %16 : vector<64xf32> to vector<64x1xf32>
    %18 = arith.addf %15, %17 : vector<64x1xf32>
    %c0_10 = arith.constant 0 : index
    %c0_11 = arith.constant 0 : index
    %19 = vector.load %arg6[%c0_10, %c0_11] : memref<64x1xf32, #tpu.memory_space<vmem>>, vector<64x1xf32>
    tpu.vector_store %arg6[%c0_10, %c0_11], %18 {strides = array<i32>} : memref<64x1xf32, #tpu.memory_space<vmem>>, vector<64x1xf32>,
    %c0_i32_12 = arith.constant 0 : i32
    %20 = arith.cmpi eq, %arg1, %c0_i32_12 : i32
    %21 = arith.extui %20 : i1 to i32
    %c0_i32_13 = arith.constant 0 : i32
    %22 = arith.cmpi ne, %21, %c0_i32_13 : i32
    scf.if %22 {
      %c0_14 = arith.constant 0 : index
      %c0_15 = arith.constant 0 : index
      %23 = vector.load %arg6[%c0_14, %c0_15] : memref<64x1xf32, #tpu.memory_space<vmem>>, vector<64x1xf32>
      %c0_16 = arith.constant 0 : index
      %c0_17 = arith.constant 0 : index
      %24 = vector.load %arg5[%c0_16, %c0_17] : memref<64x1xf32, #tpu.memory_space<vmem>>, vector<64x1xf32>
      tpu.vector_store %arg5[%c0_16, %c0_17], %23 {strides = array<i32>} : memref<64x1xf32, #tpu.memory_space<vmem>>, vector<64x1xf32>,
    } else {
    }
    return
  }
  func.func @transform_0(%arg0: i32, %arg1: i32) -> (i32, i32) {
    %c0_i32 = arith.constant 0 : i32
    return %arg0, %arg1 : i32, i32
  }
  func.func @transform_1(%arg0: i32, %arg1: i32) -> (i32, i32) {
    %c0_i32 = arith.constant 0 : i32
    %c0_i32_0 = arith.constant 0 : i32
    return %c0_i32, %arg1 : i32, i32
  }
  func.func @transform_2(%arg0: i32, %arg1: i32) -> (i32, i32) {
    %c0_i32 = arith.constant 0 : i32
    %c0_i32_0 = arith.constant 0 : i32
    return %c0_i32, %arg1 : i32, i32
  }
  func.func @transform_3(%arg0: i32, %arg1: i32) -> (i32, i32) {
    %c0_i32 = arith.constant 0 : i32
    %c0_i32_0 = arith.constant 0 : i32
    return %arg0, %c0_i32 : i32, i32
  }
}

</mosaic_0001>

<llo_original>
// kernel: tpu_custom_call.1
$region0: #{tpu_custom_call.1}
  #allocation0 [shape = 'u32[]', space=smem, size = 0x4, offset = 0x4, fixed_abs, tag = 'smem constant byte address 0x4 - core index']
  #allocation1 [shape = 'u32[72,128]{1,0:T(1,128)}', space=vmem, size = 0x9000, scoped, tag = 'internal scratch']
  #allocation2 [shape = 'f32[64,1]{1,0:T(8,128)}', space=vmem, size = 0x8000, scoped, tag = 'scratch operand']
  %s0 = inlined_call_operand.hbm [shape: f32[64,128], index: 0, kind: input, shape index: {}]
  %s1 = inlined_call_operand.hbm [shape: f32[1,128], index: 1, kind: input, shape index: {}]
  %s2 = inlined_call_operand.vmem [shape: f32[1,128], index: 2, kind: input, shape index: {}]
  %s3 = inlined_call_operand.vmem [shape: f32[64,1], index: 3, kind: output, shape index: {}]
  %s4 = sld [smem:[#allocation0]]
  $region38: #{tpu_custom_call.1} parent=0
    _
  %s6 = ssub.s32 1, %s4
  %s7 = scalar_select 0, %s6, %s4
  $region1: #{tpu_custom_call.1} parent=0
    #allocation3 [shape = 'u8[32768]{0}', space=vmem, size = 0x8000, scoped, tag = 'input window, operand 0, single buffered']
    #allocation4 [shape = 's32[1]{0}', space=sflag, size = 0x4, scoped, tag = 'scoped memory for tpu_custom_call.1']
    #allocation5 [shape = 'u8[512]{0}', space=vmem, size = 0x400, scoped, tag = 'input window, operand 1, single buffered']
    #allocation6 [shape = 's32[1]{0}', space=sflag, size = 0x4, scoped, tag = 'scoped memory for tpu_custom_call.1']
    %8 = vsyncpa [#allocation4], 0
    %9 = vsyncpa [#allocation6], 0
    // Predicated region
    $region2: #{tpu_custom_call.1} parent=1 // pred_check
      _
    $region3: #{tpu_custom_call.1} parent=1 // pred_check_branch
      %11 = sbr.rel (0) target = $region5
    $region4: #{tpu_custom_call.1} parent=1 // pred_region
      %13 = vsyncadd [#allocation4], 0
      %s14 = sshll.u32 %s0, 4
      %s15 = int_to_ptr.hbm [resolvable:$true] %s14
      %s16 = sshll.u32 [#allocation3], 4
      %s17 = int_to_ptr.vmem [resolvable:$true] %s16
      %22 = dma.hbm_to_vmem [thread:$0]  %s15, 1024, %s17, [#allocation4], 128, 128, 8
    $region5: #{tpu_custom_call.1} parent=1 // pred_fallthru
      _
    // Predicated region
    $region6: #{tpu_custom_call.1} parent=1 // pred_check
      _
    $region7: #{tpu_custom_call.1} parent=1 // pred_check_branch
      %24 = sbr.rel (0) target = $region9
    $region8: #{tpu_custom_call.1} parent=1 // pred_region
      %26 = vsyncadd [#allocation6], 0
      %s28 = sshll.u32 %s1, 4
      %s29 = int_to_ptr.hbm [resolvable:$true] %s28
      %s30 = sshll.u32 [#allocation5], 4
      %s31 = int_to_ptr.vmem [resolvable:$true] %s30
      %33 = dma.hbm_to_vmem [thread:$0]  %s29, 16, %s31, [#allocation6]
    $region9: #{tpu_custom_call.1} parent=1 // pred_fallthru
      _
    // Predicated region
    $region10: #{tpu_custom_call.1} parent=1 // pred_check
      _
    $region11: #{tpu_custom_call.1} parent=1 // pred_check_branch
      %35 = sbr.rel (0) target = $region13
    $region12: #{tpu_custom_call.1} parent=1 // pred_region
      _
    $region13: #{tpu_custom_call.1} parent=1 // pred_fallthru
      _
    // Predicated region
    $region14: #{tpu_custom_call.1} parent=1 // pred_check
      _
    $region15: #{tpu_custom_call.1} parent=1 // pred_check_branch
      %37 = sbr.rel (0) target = $region17
    $region16: #{tpu_custom_call.1} parent=1 // pred_region
      %39 = dma.done [#allocation4], 1024
    $region17: #{tpu_custom_call.1} parent=1 // pred_fallthru
      _
    // Predicated region
    $region18: #{tpu_custom_call.1} parent=1 // pred_check
      _
    $region19: #{tpu_custom_call.1} parent=1 // pred_check_branch
      %41 = sbr.rel (0) target = $region21
    $region20: #{tpu_custom_call.1} parent=1 // pred_region
      %43 = dma.done [#allocation6], 16
    $region21: #{tpu_custom_call.1} parent=1 // pred_fallthru
      _
    %p44 = scmp.eq.s32.totalorder 0, 0
    // Predicated region
    $region22: #{tpu_custom_call.1} parent=1 // pred_check
      %p45 = pneg %p44
    $region23: #{tpu_custom_call.1} parent=1 // pred_check_branch
      %47 = sbr.rel (%p45) target = $region25
    $region24: #{tpu_custom_call.1} parent=1 // pred_region
      %vm48 = vcmask 7168
      %49 = vst.msk [vmem:[#allocation2] sm:$0xff] %vm48, 0.0
      %50 = vst.msk [vmem:[#allocation2 + $0x8] sm:$0xff] %vm48, 0.0
      %51 = vst.msk [vmem:[#allocation2 + $0x10] sm:$0xff] %vm48, 0.0
      %52 = vst.msk [vmem:[#allocation2 + $0x18] sm:$0xff] %vm48, 0.0
      %53 = vst.msk [vmem:[#allocation2 + $0x20] sm:$0xff] %vm48, 0.0
      %54 = vst.msk [vmem:[#allocation2 + $0x28] sm:$0xff] %vm48, 0.0
      %55 = vst.msk [vmem:[#allocation2 + $0x30] sm:$0xff] %vm48, 0.0
      %56 = vst.msk [vmem:[#allocation2 + $0x38] sm:$0xff] %vm48, 0.0
    $region25: #{tpu_custom_call.1} parent=1 // pred_fallthru
      _
    %v57 = vld [vmem:[#allocation3] sm:$0xff]
    %v58 = vld [vmem:[#allocation3 + $0x8] sm:$0xff]
    %v59 = vld [vmem:[#allocation3 + $0x10] sm:$0xff]
    %v60 = vld [vmem:[#allocation3 + $0x18] sm:$0xff]
    %v61 = vld [vmem:[#allocation3 + $0x20] sm:$0xff]
    %v62 = vld [vmem:[#allocation3 + $0x28] sm:$0xff]
    %v63 = vld [vmem:[#allocation3 + $0x30] sm:$0xff]
    %v64 = vld [vmem:[#allocation3 + $0x38] sm:$0xff]
    %v65 = vmax.f32 %v57, 0.0
    %v66 = vmax.f32 %v58, 0.0
    %v67 = vmax.f32 %v59, 0.0
    %v68 = vmax.f32 %v60, 0.0
    %v69 = vmax.f32 %v61, 0.0
    %v70 = vmax.f32 %v62, 0.0
    %v71 = vmax.f32 %v63, 0.0
    %v72 = vmax.f32 %v64, 0.0
    %v73 = vld [vmem:[#allocation5] sm:$0x1]
    %v75 = vperm.slane %v73, 0
    %v77 = vmul.f32 %v65, %v75
    %v78 = vmul.f32 %v66, %v75
    %v79 = vmul.f32 %v67, %v75
    %v80 = vmul.f32 %v68, %v75
    %v81 = vmul.f32 %v69, %v75
    %v82 = vmul.f32 %v70, %v75
    %v83 = vmul.f32 %v71, %v75
    %v84 = vmul.f32 %v72, %v75
    %v85 = vmin.f32 %v57, 0.0
    %v86 = vmin.f32 %v58, 0.0
    %v87 = vmin.f32 %v59, 0.0
    %v88 = vmin.f32 %v60, 0.0
    %v89 = vmin.f32 %v61, 0.0
    %v90 = vmin.f32 %v62, 0.0
    %v91 = vmin.f32 %v63, 0.0
    %v92 = vmin.f32 %v64, 0.0
    %v93 = vld [vmem:[%s2] sm:$0x1]
    %v95 = vperm.slane %v93, 0
    %v97 = vmul.f32 %v85, %v95
    %v98 = vmul.f32 %v86, %v95
    %v99 = vmul.f32 %v87, %v95
    %v100 = vmul.f32 %v88, %v95
    %v101 = vmul.f32 %v89, %v95
    %v102 = vmul.f32 %v90, %v95
    %v103 = vmul.f32 %v91, %v95
    %v104 = vmul.f32 %v92, %v95
    %v105 = vadd.f32 %v77, %v97
    %v106 = vadd.f32 %v78, %v98
    %v107 = vadd.f32 %v79, %v99
    %v108 = vadd.f32 %v80, %v100
    %v109 = vadd.f32 %v81, %v101
    %v110 = vadd.f32 %v82, %v102
    %v111 = vadd.f32 %v83, %v103
    %v112 = vadd.f32 %v84, %v104
    %v113 = vld [vmem:[#allocation2] sm:$0xff]
    %v114 = vld [vmem:[#allocation2 + $0x8] sm:$0xff]
    %v115 = vld [vmem:[#allocation2 + $0x10] sm:$0xff]
    %v116 = vld [vmem:[#allocation2 + $0x18] sm:$0xff]
    %v117 = vld [vmem:[#allocation2 + $0x20] sm:$0xff]
    %v118 = vld [vmem:[#allocation2 + $0x28] sm:$0xff]
    %v119 = vld [vmem:[#allocation2 + $0x30] sm:$0xff]
    %v120 = vld [vmem:[#allocation2 + $0x38] sm:$0xff]
    %121 = vadd.xlane.f32.xlu0 %v105
    %v122 = vpop.xlane.xlu0 %121
    %123 = vadd.xlane.f32.xlu0 %v106
    %v124 = vpop.xlane.xlu0 %123
    %125 = vadd.xlane.f32.xlu0 %v107
    %v126 = vpop.xlane.xlu0 %125
    %127 = vadd.xlane.f32.xlu0 %v108
    %v128 = vpop.xlane.xlu0 %127
    %129 = vadd.xlane.f32.xlu0 %v109
    %v130 = vpop.xlane.xlu0 %129
    %131 = vadd.xlane.f32.xlu0 %v110
    %v132 = vpop.xlane.xlu0 %131
    %133 = vadd.xlane.f32.xlu0 %v111
    %v134 = vpop.xlane.xlu0 %133
    %135 = vadd.xlane.f32.xlu0 %v112
    %v136 = vpop.xlane.xlu0 %135
    %v137 = vadd.f32 %v113, %v122
    %v138 = vadd.f32 %v114, %v124
    %v139 = vadd.f32 %v115, %v126
    %v140 = vadd.f32 %v116, %v128
    %v141 = vadd.f32 %v117, %v130
    %v142 = vadd.f32 %v118, %v132
    %v143 = vadd.f32 %v119, %v134
    %v144 = vadd.f32 %v120, %v136
    %vm145 = vcmask 7168
    %146 = vst.msk [vmem:[#allocation2] sm:$0xff] %vm145, %v137
    %147 = vst.msk [vmem:[#allocation2 + $0x8] sm:$0xff] %vm145, %v138
    %148 = vst.msk [vmem:[#allocation2 + $0x10] sm:$0xff] %vm145, %v139
    %149 = vst.msk [vmem:[#allocation2 + $0x18] sm:$0xff] %vm145, %v140
    %150 = vst.msk [vmem:[#allocation2 + $0x20] sm:$0xff] %vm145, %v141
    %151 = vst.msk [vmem:[#allocation2 + $0x28] sm:$0xff] %vm145, %v142
    %152 = vst.msk [vmem:[#allocation2 + $0x30] sm:$0xff] %vm145, %v143
    %153 = vst.msk [vmem:[#allocation2 + $0x38] sm:$0xff] %vm145, %v144
    // Predicated region
    $region26: #{tpu_custom_call.1} parent=1 // pred_check
      %p154 = pneg %p44
    $region27: #{tpu_custom_call.1} parent=1 // pred_check_branch
      %156 = sbr.rel (%p154) target = $region29
    $region28: #{tpu_custom_call.1} parent=1 // pred_region
      %v157 = vld [vmem:[#allocation2] sm:$0xff]
      %v158 = vld [vmem:[#allocation2 + $0x8] sm:$0xff]
      %v159 = vld [vmem:[#allocation2 + $0x10] sm:$0xff]
      %v160 = vld [vmem:[#allocation2 + $0x18] sm:$0xff]
      %v161 = vld [vmem:[#allocation2 + $0x20] sm:$0xff]
      %v162 = vld [vmem:[#allocation2 + $0x28] sm:$0xff]
      %v163 = vld [vmem:[#allocation2 + $0x30] sm:$0xff]
      %v164 = vld [vmem:[#allocation2 + $0x38] sm:$0xff]
      %165 = vst.msk [vmem:[%s3] sm:$0xff] %vm145, %v157
      %166 = vst.msk [vmem:[%s3 + $0x8] sm:$0xff] %vm145, %v158
      %167 = vst.msk [vmem:[%s3 + $0x10] sm:$0xff] %vm145, %v159
      %168 = vst.msk [vmem:[%s3 + $0x18] sm:$0xff] %vm145, %v160
      %169 = vst.msk [vmem:[%s3 + $0x20] sm:$0xff] %vm145, %v161
      %170 = vst.msk [vmem:[%s3 + $0x28] sm:$0xff] %vm145, %v162
      %171 = vst.msk [vmem:[%s3 + $0x30] sm:$0xff] %vm145, %v163
      %172 = vst.msk [vmem:[%s3 + $0x38] sm:$0xff] %vm145, %v164
    $region29: #{tpu_custom_call.1} parent=1 // pred_fallthru
      _
    // Predicated region
    $region30: #{tpu_custom_call.1} parent=1 // pred_check
      _
    $region31: #{tpu_custom_call.1} parent=1 // pred_check_branch
      %174 = sbr.rel (0) target = $region33
    $region32: #{tpu_custom_call.1} parent=1 // pred_region
      _
    $region33: #{tpu_custom_call.1} parent=1 // pred_fallthru
      _
    // Predicated region
    $region34: #{tpu_custom_call.1} parent=1 // pred_check
      _
    $region35: #{tpu_custom_call.1} parent=1 // pred_check_branch
      %176 = sbr.rel (0) target = $region37
    $region36: #{tpu_custom_call.1} parent=1 // pred_region
      _
    $region37: #{tpu_custom_call.1} parent=1 // pred_fallthru
      _
    %177 = vsyncpa [#allocation4], 1
    %178 = vsyncpa [#allocation6], 1

</llo_original>
